<compile_context>
chip_gen: v7x
topology: tpu7x:2x2x1
jax: 0.10.0
libtpu: 0.0.40
codegen_flags: <defaults>
</compile_context>

<pallas_src>
import functools

import jax
import jax.numpy as jnp
from jax import lax
from jax.experimental import pallas as pl
from jax.experimental.pallas import tpu as pltpu


def _round_up(x: int, m: int) -> int:
    return (x + m - 1) // m * m


def _potential_mlp_kernel(num_hidden, *refs):
    # refs layout (in_refs..., out_ref):
    #   refs[0]                        x_ref      [tb, obs_dim]
    #   refs[1 + 2*l], refs[2 + 2*l]   (w_l, b_l) hidden layer l (VMEM resident)
    #   refs[1 + 2*num_hidden]         wf_row8    [8, h_last] (row 0 = W_out^T)
    #   refs[2 + 2*num_hidden]         bf         [1]  (SMEM scalar)
    #   refs[3 + 2*num_hidden]         out_ref    [1, tb] lane-dense potentials
    x_ref = refs[0]
    wf_ref = refs[1 + 2 * num_hidden]
    bf_ref = refs[2 + 2 * num_hidden]
    out_ref = refs[3 + 2 * num_hidden]

    h = x_ref[...]
    for l in range(num_hidden):
        w = refs[1 + 2 * l][...]
        b = refs[2 + 2 * l][...]
        h = jnp.maximum(
            jnp.dot(h, w, preferred_element_type=jnp.float32) + b, 0.0)

    # Squeeze head in row form: contract the hidden dim of both operands.
    # wf_row8 has the output weights in row 0 (rows 1..7 are zero padding),
    # so row 0 of the (8, tb) result is the potential for every batch row.
    dn = (((1,), (1,)), ((), ()))
    row = lax.dot_general(wf_ref[...], h, dn,
                          preferred_element_type=jnp.float32)[0:1, :]
    out_ref[...] = row + bf_ref[0]


def basic_potential_mlp_forward(state, params, tile_rows=512):
    """BasicPotentialMLP.forward: flatten obs -> MLP -> scalar per batch row."""
    batch = state.shape[0]
    f32 = jnp.float32
    x = state.reshape(batch, -1).astype(f32)            # flatten_input=True
    obs_dim = x.shape[1]

    hidden_ws = [w.astype(f32) for w in params["hidden_ws"]]
    hidden_bs = [b.astype(f32).reshape(1, -1) for b in params["hidden_bs"]]
    num_hidden = len(hidden_ws)
    assert num_hidden >= 1 and hidden_ws[0].shape[0] == obs_dim
    h_last = hidden_ws[-1].shape[1]

    # Output head (hidden -> 1), stored as an 8-sublane row block, weights in
    # row 0. Scalar bias goes to SMEM.
    wf_row8 = jnp.pad(params["w_out"].astype(f32).reshape(1, h_last),
                      ((0, 7), (0, 0)))
    bf = jnp.asarray(params["b_out"], f32).reshape(1)

    # Batch tiling: one tile when small (rounded to 8 sublanes), else tile_rows.
    assert tile_rows % 8 == 0
    tb = tile_rows if batch > tile_rows else _round_up(batch, 8)
    padded = _round_up(batch, tb)
    nb = padded // tb
    x = jnp.pad(x, ((0, padded - batch), (0, 0)))

    def tiled(shape):       # batch-tiled input
        return pl.BlockSpec(shape, lambda i: (i, 0))

    def resident(shape):    # constant block index -> VMEM resident weights
        return pl.BlockSpec(shape, lambda i: (0, 0))

    in_specs = [tiled((tb, obs_dim))]
    operands = [x]
    for w, b in zip(hidden_ws, hidden_bs):
        in_specs += [resident(w.shape), resident(b.shape)]
        operands += [w, b]
    in_specs += [resident((8, h_last)),
                 pl.BlockSpec(memory_space=pltpu.MemorySpace.SMEM)]
    operands += [wf_row8, bf]

    out_spec = pl.BlockSpec((None, 1, tb), lambda i: (i, 0, 0))

    kernel = functools.partial(_potential_mlp_kernel, num_hidden)

    out = pl.pallas_call(
        kernel,
        out_shape=jax.ShapeDtypeStruct((nb, 1, tb), f32),
        grid_spec=pltpu.PrefetchScalarGridSpec(
            num_scalar_prefetch=0,
            grid=(nb,),
            in_specs=in_specs,
            out_specs=out_spec,
        ),
        compiler_params=pltpu.CompilerParams(
            dimension_semantics=("parallel",)),
    )(*operands)

    potential = out.reshape(padded)[:batch]
    assert potential.shape == (batch,)
    return potential


def _reference_forward(state, params):
    """Pure-JAX reference mirroring the PyTorch BasicPotentialMLP forward."""
    x = state.reshape(state.shape[0], -1).astype(jnp.float32)
    h = x
    for w, b in zip(params["hidden_ws"], params["hidden_bs"]):
        h = jnp.maximum(h @ w + b.reshape(1, -1), 0.0)
    return (h @ params["w_out"] + params["b_out"]).reshape(-1)


def make_params(key, obs_dim, hid_sizes):
    """Parameters of build_mlp(in_size=obs_dim, hid_sizes, squeeze_output=True)."""
    sizes = [obs_dim] + list(hid_sizes)
    keys = jax.random.split(key, 2 * len(hid_sizes) + 2)
    scale = 0.1
    hidden_ws, hidden_bs = [], []
    for i, (d_in, d_out) in enumerate(zip(sizes[:-1], sizes[1:])):
        hidden_ws.append(scale * jax.random.normal(keys[2 * i], (d_in, d_out),
                                                   jnp.float32))
        hidden_bs.append(scale * jax.random.normal(keys[2 * i + 1], (1, d_out),
                                                   jnp.float32))
    w_out = scale * jax.random.normal(keys[-2], (sizes[-1], 1), jnp.float32)
    b_out = scale * jax.random.normal(keys[-1], (1, 1), jnp.float32)
    return {"hidden_ws": hidden_ws, "hidden_bs": hidden_bs,
            "w_out": w_out, "b_out": b_out}


if __name__ == "__main__":
    batch, obs_shape, hid_sizes = 384, (4, 4), (32, 32)
    obs_dim = obs_shape[0] * obs_shape[1]

    key = jax.random.PRNGKey(0)
    k_s, k_p = jax.random.split(key, 2)
    # Multi-dim observation exercises the flatten_input path.
    state = jax.random.normal(k_s, (batch,) + obs_shape, jnp.float32)
    params = make_params(k_p, obs_dim, hid_sizes)

    # Multi-tile grid: 3 batch tiles of 128 rows.
    pot = basic_potential_mlp_forward(state, params, tile_rows=128)
    pot = jax.block_until_ready(pot)
    ref = _reference_forward(state, params)
    assert pot.shape == (batch,)
    assert jnp.allclose(pot, ref, atol=1e-4, rtol=1e-4), (pot, ref)

    # Ragged small batch exercising the padding path (single tile).
    small = 20
    pot_s = basic_potential_mlp_forward(state[:small], params)
    pot_s = jax.block_until_ready(pot_s)
    ref_s = _reference_forward(state[:small], params)
    assert pot_s.shape == (small,)
    assert jnp.allclose(pot_s, ref_s, atol=1e-4, rtol=1e-4), (pot_s, ref_s)

    print("KERNEL_OK")
</pallas_src>

<mosaic_0001>
module attributes {stable_mosaic.version = 11 : i64} {
  func.func @_potential_mlp_kernel(%arg0: i32, %arg1: memref<128x16xf32, #tpu.memory_space<vmem>>, %arg2: memref<16x32xf32, #tpu.memory_space<vmem>>, %arg3: memref<1x32xf32, #tpu.memory_space<vmem>>, %arg4: memref<32x32xf32, #tpu.memory_space<vmem>>, %arg5: memref<1x32xf32, #tpu.memory_space<vmem>>, %arg6: memref<8x32xf32, #tpu.memory_space<vmem>>, %arg7: memref<1xf32, #tpu.memory_space<smem>>, %arg8: memref<1x1x128xf32, #tpu.memory_space<vmem>>) attributes {dimension_semantics = [#tpu.dimension_semantics<parallel>], iteration_bounds = array<i64: 3>, scalar_prefetch = 0 : i64, scratch_operands = 0 : i64, tpu.core_type = #tpu.core_type<tc>, window_params = [{transform_indices = @transform_0, window_bounds = array<i64: 128, 16>}, {pipeline_mode = #tpu.pipeline_mode<synchronous>, transform_indices = @transform_1, window_bounds = array<i64: 16, 32>}, {pipeline_mode = #tpu.pipeline_mode<synchronous>, transform_indices = @transform_2, window_bounds = array<i64: 1, 32>}, {pipeline_mode = #tpu.pipeline_mode<synchronous>, transform_indices = @transform_3, window_bounds = array<i64: 32, 32>}, {pipeline_mode = #tpu.pipeline_mode<synchronous>, transform_indices = @transform_4, window_bounds = array<i64: 1, 32>}, {pipeline_mode = #tpu.pipeline_mode<synchronous>, transform_indices = @transform_5, window_bounds = array<i64: 8, 32>}, {transform_indices = @transform_6, window_bounds = array<i64: 1>}, {transform_indices = @transform_7, window_bounds = array<i64: 1, 1, 128>}]} {
    %c0 = arith.constant 0 : index
    %c0_0 = arith.constant 0 : index
    %0 = vector.load %arg1[%c0, %c0_0] : memref<128x16xf32, #tpu.memory_space<vmem>>, vector<128x16xf32>
    %c0_1 = arith.constant 0 : index
    %c0_2 = arith.constant 0 : index
    %1 = vector.load %arg2[%c0_1, %c0_2] : memref<16x32xf32, #tpu.memory_space<vmem>>, vector<16x32xf32>
    %c0_3 = arith.constant 0 : index
    %c0_4 = arith.constant 0 : index
    %2 = vector.load %arg3[%c0_3, %c0_4] : memref<1x32xf32, #tpu.memory_space<vmem>>, vector<1x32xf32>
    %cst = arith.constant dense<0.000000e+00> : vector<128x32xf32>
    %3 = tpu.matmul %0, %1, %cst {dimension_numbers = #tpu.dot_dimension_numbers<[1], [0], [0], [1], [0, 0, 1, 1], [], []>} : vector<128x16xf32>, vector<16x32xf32>, vector<128x32xf32> -> vector<128x32xf32>
    %4 = vector.broadcast %2 : vector<1x32xf32> to vector<128x32xf32>
    %5 = arith.addf %3, %4 : vector<128x32xf32>
    %cst_5 = arith.constant 0.000000e+00 : f32
    %6 = vector.broadcast %cst_5 : f32 to vector<128x32xf32>
    %7 = arith.maximumf %5, %6 : vector<128x32xf32>
    %c0_6 = arith.constant 0 : index
    %c0_7 = arith.constant 0 : index
    %8 = vector.load %arg4[%c0_6, %c0_7] : memref<32x32xf32, #tpu.memory_space<vmem>>, vector<32x32xf32>
    %c0_8 = arith.constant 0 : index
    %c0_9 = arith.constant 0 : index
    %9 = vector.load %arg5[%c0_8, %c0_9] : memref<1x32xf32, #tpu.memory_space<vmem>>, vector<1x32xf32>
    %cst_10 = arith.constant dense<0.000000e+00> : vector<128x32xf32>
    %10 = tpu.matmul %7, %8, %cst_10 {dimension_numbers = #tpu.dot_dimension_numbers<[1], [0], [0], [1], [0, 0, 1, 1], [], []>} : vector<128x32xf32>, vector<32x32xf32>, vector<128x32xf32> -> vector<128x32xf32>
    %11 = vector.broadcast %9 : vector<1x32xf32> to vector<128x32xf32>
    %12 = arith.addf %10, %11 : vector<128x32xf32>
    %cst_11 = arith.constant 0.000000e+00 : f32
    %13 = vector.broadcast %cst_11 : f32 to vector<128x32xf32>
    %14 = arith.maximumf %12, %13 : vector<128x32xf32>
    %c0_12 = arith.constant 0 : index
    %c0_13 = arith.constant 0 : index
    %15 = vector.load %arg6[%c0_12, %c0_13] : memref<8x32xf32, #tpu.memory_space<vmem>>, vector<8x32xf32>
    %cst_14 = arith.constant dense<0.000000e+00> : vector<8x128xf32>
    %16 = tpu.matmul %15, %14, %cst_14 {dimension_numbers = #tpu.dot_dimension_numbers<[1], [1], [0], [0], [0, 0, 1, 0], [], []>} : vector<8x32xf32>, vector<128x32xf32>, vector<8x128xf32> -> vector<8x128xf32>
    %17 = vector.extract_strided_slice %16 {offsets = [0, 0], sizes = [1, 128], strides = [1, 1]} : vector<8x128xf32> to vector<1x128xf32>
    %c0_15 = arith.constant 0 : index
    %18 = memref.load %arg7[%c0_15] : memref<1xf32, #tpu.memory_space<smem>>
    %19 = vector.broadcast %18 : f32 to vector<1x128xf32>
    %20 = arith.addf %17, %19 : vector<1x128xf32>
    %c0_16 = arith.constant 0 : index
    %c0_17 = arith.constant 0 : index
    %c0_18 = arith.constant 0 : index
    %21 = vector.load %arg8[%c0_16, %c0_17, %c0_18] : memref<1x1x128xf32, #tpu.memory_space<vmem>>, vector<1x1x128xf32>
    %22 = vector.shape_cast %21 : vector<1x1x128xf32> to vector<1x128xf32>
    %23 = vector.shape_cast %20 : vector<1x128xf32> to vector<1x1x128xf32>
    tpu.vector_store %arg8[%c0_16, %c0_17, %c0_18], %23 {strides = array<i32>} : memref<1x1x128xf32, #tpu.memory_space<vmem>>, vector<1x1x128xf32>,
    return
  }
  func.func @transform_0(%arg0: i32) -> (i32, i32) {
    %c0_i32 = arith.constant 0 : i32
    %c0_i32_0 = arith.constant 0 : i32
    return %arg0, %c0_i32 : i32, i32
  }
  func.func @transform_1(%arg0: i32) -> (i32, i32) {
    %c0_i32 = arith.constant 0 : i32
    %c0_i32_0 = arith.constant 0 : i32
    %c0_i32_1 = arith.constant 0 : i32
    return %c0_i32, %c0_i32_0 : i32, i32
  }
  func.func @transform_2(%arg0: i32) -> (i32, i32) {
    %c0_i32 = arith.constant 0 : i32
    %c0_i32_0 = arith.constant 0 : i32
    %c0_i32_1 = arith.constant 0 : i32
    return %c0_i32, %c0_i32_0 : i32, i32
  }
  func.func @transform_3(%arg0: i32) -> (i32, i32) {
    %c0_i32 = arith.constant 0 : i32
    %c0_i32_0 = arith.constant 0 : i32
    %c0_i32_1 = arith.constant 0 : i32
    return %c0_i32, %c0_i32_0 : i32, i32
  }
  func.func @transform_4(%arg0: i32) -> (i32, i32) {
    %c0_i32 = arith.constant 0 : i32
    %c0_i32_0 = arith.constant 0 : i32
    %c0_i32_1 = arith.constant 0 : i32
    return %c0_i32, %c0_i32_0 : i32, i32
  }
  func.func @transform_5(%arg0: i32) -> (i32, i32) {
    %c0_i32 = arith.constant 0 : i32
    %c0_i32_0 = arith.constant 0 : i32
    %c0_i32_1 = arith.constant 0 : i32
    return %c0_i32, %c0_i32_0 : i32, i32
  }
  func.func @transform_6(%arg0: i32) -> i32 {
    %c0_i32 = arith.constant 0 : i32
    %c0_i32_0 = arith.constant 0 : i32
    return %c0_i32 : i32
  }
  func.func @transform_7(%arg0: i32) -> (i32, i32, i32) {
    %c0_i32 = arith.constant 0 : i32
    %c0_i32_0 = arith.constant 0 : i32
    %c0_i32_1 = arith.constant 0 : i32
    return %arg0, %c0_i32, %c0_i32_0 : i32, i32, i32
  }
}

</mosaic_0001>

<llo_original>
// kernel: tpu_custom_call.1
$region0: #{tpu_custom_call.1}
  #allocation0 [shape = 'u32[]', space=smem, size = 0x4, offset = 0x4, fixed_abs, tag = 'smem constant byte address 0x4 - core index']
  #allocation1 [shape = 'u32[144,128]{1,0:T(1,128)}', space=vmem, size = 0x12000, scoped, tag = 'internal scratch']
  #allocation2 [shape = 'f32[1]{0:T(128)S(6)}', space=smem, size = 0x200, scoped, tag = 'scoped memory for tpu_custom_call.1']
  %s0 = inlined_call_operand.vmem [shape: f32[384,16], index: 0, kind: input, shape index: {}]
  %s1 = inlined_call_operand.vmem [shape: f32[16,32], index: 1, kind: input, shape index: {}]
  %s2 = inlined_call_operand.vmem [shape: f32[1,32], index: 2, kind: input, shape index: {}]
  %s3 = inlined_call_operand.vmem [shape: f32[32,32], index: 3, kind: input, shape index: {}]
  %s4 = inlined_call_operand.vmem [shape: f32[1,32], index: 4, kind: input, shape index: {}]
  %s5 = inlined_call_operand.vmem [shape: f32[8,32], index: 5, kind: input, shape index: {}]
  %s6 = inlined_call_operand.<no memory space> [shape: f32[1], index: 6, kind: input, shape index: {}]
  %s7 = inlined_call_operand.hbm [shape: f32[3,1,128], index: 7, kind: output, shape index: {}]
  %s8 = sld [smem:[#allocation0]]
  $region61: #{tpu_custom_call.1} parent=0
    _
  %s10 = ssub.s32 1, %s8
  %s11 = scalar_select 0, %s10, %s8
  %12 = sst [smem:[#allocation2]] %s6
  $region1: #{tpu_custom_call.1} parent=0
    #allocation3 [shape = 'u8[1024]{0}', space=vmem, size = 0x400, scoped, tag = 'output window, operand 0']
    #allocation4 [shape = 's32[2]{0}', space=sflag, size = 0x8, scoped, tag = 'scoped memory for tpu_custom_call.1']
    %13 = vsyncpa [#allocation4], 0
    %s14 = scalar_lea.sflag [#allocation4], 1
    %15 = vsyncpa %s14, 0
    loop: start=0, step=1, limit=5
    $region2: #{tpu_custom_call.1} parent=1 // loop_pre_header
      _
    $region3: #{tpu_custom_call.1} parent=1 // loop_header
      %s17 = sphi 0, %s21
      %p18 = scmp.ge.s32.totalorder %s17, 5
      %s27 = sphi 0, %s29
      %s30 = sphi 0, %s27
      %s31 = sphi 0, %s30
      %s47 = sphi 0, %s31
      %s51 = sphi 0, %s51
      %s53 = sphi 0, %s51
      %s54 = sphi 0, %s53
      %s68 = sphi 0, %s54
      %s72 = sphi 0, %s72
      %s74 = sphi 0, %s72
      %s75 = sphi 0, %s74
      %s89 = sphi 0, %s75
      %s93 = sphi 0, %s93
      %s95 = sphi 0, %s93
      %s96 = sphi 0, %s95
      %s110 = sphi 0, %s96
      %s114 = sphi 0, %s114
      %s116 = sphi 0, %s114
      %s117 = sphi 0, %s116
      %s131 = sphi 0, %s117
      %s135 = sphi 0, %s135
      %s137 = sphi 0, %s135
      %s138 = sphi 0, %s137
      %s152 = sphi 0, %s138
      %s156 = sphi 0, %s156
      %s158 = sphi 0, %s156
      %s159 = sphi 0, %s158
      %s173 = sphi 0, %s159
      %s179 = sphi 0, %s181
      %s182 = sphi 0, %s179
      %s183 = sphi 0, %s182
      %s199 = sphi 0, %s183
    $region4: #{tpu_custom_call.1} parent=1 // loop_header_branch
      %20 = sbr.rel (%p18) target = $region8
    $region5: #{tpu_custom_call.1} parent=1 // loop_body
      %s22 = ssub.s32 %s17, 1
      %s23 = ssub.s32 %s17, 2
      %s24 = sadd.s32 %s17, 1
      %s25 = ssub.s32 %s17, %s24
      %p26 = scmp.eq.s32.totalorder %s25, 0
      %s28 = sadd.s32 %s27, 1
      %s29 = scalar_select %p26, %s27, %s28
      %p32 = pneg %p26
      %p33 = scmp.eq.s32.totalorder %s17, 2
      %p34 = por %p32, %p33
      %p35 = scmp.ne.s32.totalorder %s27, %s30
      %p36 = scmp.eq.s32.totalorder %s17, 0
      %p37 = por %p35, %p36
      %p38 = scmp.ne.s32.totalorder %s27, %s30
      %p39 = scmp.eq.s32.totalorder %s22, 2
      %p40 = por %p38, %p39
      %p41 = scmp.ne.s32.totalorder %s30, %s31
      %p42 = scmp.eq.s32.totalorder %s22, 0
      %p43 = por %p41, %p42
      %p44 = scmp.ne.s32.totalorder %s30, %s31
      %p45 = scmp.eq.s32.totalorder %s23, 2
      %p46 = por %p44, %p45
      %p48 = scmp.ne.s32.totalorder %s31, %s47
      %p49 = scmp.eq.s32.totalorder %s23, 0
      %p50 = por %p48, %p49
      %s52 = sadd.s32 %s51, 1
      %p55 = scmp.eq.s32.totalorder %s17, 2
      %p56 = scmp.ne.s32.totalorder %s51, %s53
      %p57 = scmp.eq.s32.totalorder %s17, 0
      %p58 = por %p56, %p57
      %p59 = scmp.ne.s32.totalorder %s51, %s53
      %p60 = scmp.eq.s32.totalorder %s22, 2
      %p61 = por %p59, %p60
      %p62 = scmp.ne.s32.totalorder %s53, %s54
      %p63 = scmp.eq.s32.totalorder %s22, 0
      %p64 = por %p62, %p63
      %p65 = scmp.ne.s32.totalorder %s53, %s54
      %p66 = scmp.eq.s32.totalorder %s23, 2
      %p67 = por %p65, %p66
      %p69 = scmp.ne.s32.totalorder %s54, %s68
      %p70 = scmp.eq.s32.totalorder %s23, 0
      %p71 = por %p69, %p70
      %s73 = sadd.s32 %s72, 1
      %p76 = scmp.eq.s32.totalorder %s17, 2
      %p77 = scmp.ne.s32.totalorder %s72, %s74
      %p78 = scmp.eq.s32.totalorder %s17, 0
      %p79 = por %p77, %p78
      %p80 = scmp.ne.s32.totalorder %s72, %s74
      %p81 = scmp.eq.s32.totalorder %s22, 2
      %p82 = por %p80, %p81
      %p83 = scmp.ne.s32.totalorder %s74, %s75
      %p84 = scmp.eq.s32.totalorder %s22, 0
      %p85 = por %p83, %p84
      %p86 = scmp.ne.s32.totalorder %s74, %s75
      %p87 = scmp.eq.s32.totalorder %s23, 2
      %p88 = por %p86, %p87
      %p90 = scmp.ne.s32.totalorder %s75, %s89
      %p91 = scmp.eq.s32.totalorder %s23, 0
      %p92 = por %p90, %p91
      %s94 = sadd.s32 %s93, 1
      %p97 = scmp.eq.s32.totalorder %s17, 2
      %p98 = scmp.ne.s32.totalorder %s93, %s95
      %p99 = scmp.eq.s32.totalorder %s17, 0
      %p100 = por %p98, %p99
      %p101 = scmp.ne.s32.totalorder %s93, %s95
      %p102 = scmp.eq.s32.totalorder %s22, 2
      %p103 = por %p101, %p102
      %p104 = scmp.ne.s32.totalorder %s95, %s96
      %p105 = scmp.eq.s32.totalorder %s22, 0
      %p106 = por %p104, %p105
      %p107 = scmp.ne.s32.totalorder %s95, %s96
      %p108 = scmp.eq.s32.totalorder %s23, 2
      %p109 = por %p107, %p108
      %p111 = scmp.ne.s32.totalorder %s96, %s110
      %p112 = scmp.eq.s32.totalorder %s23, 0
      %p113 = por %p111, %p112
      %s115 = sadd.s32 %s114, 1
      %p118 = scmp.eq.s32.totalorder %s17, 2
      %p119 = scmp.ne.s32.totalorder %s114, %s116
      %p120 = scmp.eq.s32.totalorder %s17, 0
      %p121 = por %p119, %p120
      %p122 = scmp.ne.s32.totalorder %s114, %s116
      %p123 = scmp.eq.s32.totalorder %s22, 2
      %p124 = por %p122, %p123
      %p125 = scmp.ne.s32.totalorder %s116, %s117
      %p126 = scmp.eq.s32.totalorder %s22, 0
      %p127 = por %p125, %p126
      %p128 = scmp.ne.s32.totalorder %s116, %s117
      %p129 = scmp.eq.s32.totalorder %s23, 2
      %p130 = por %p128, %p129
      %p132 = scmp.ne.s32.totalorder %s117, %s131
      %p133 = scmp.eq.s32.totalorder %s23, 0
      %p134 = por %p132, %p133
      %s136 = sadd.s32 %s135, 1
      %p139 = scmp.eq.s32.totalorder %s17, 2
      %p140 = scmp.ne.s32.totalorder %s135, %s137
      %p141 = scmp.eq.s32.totalorder %s17, 0
      %p142 = por %p140, %p141
      %p143 = scmp.ne.s32.totalorder %s135, %s137
      %p144 = scmp.eq.s32.totalorder %s22, 2
      %p145 = por %p143, %p144
      %p146 = scmp.ne.s32.totalorder %s137, %s138
      %p147 = scmp.eq.s32.totalorder %s22, 0
      %p148 = por %p146, %p147
      %p149 = scmp.ne.s32.totalorder %s137, %s138
      %p150 = scmp.eq.s32.totalorder %s23, 2
      %p151 = por %p149, %p150
      %p153 = scmp.ne.s32.totalorder %s138, %s152
      %p154 = scmp.eq.s32.totalorder %s23, 0
      %p155 = por %p153, %p154
      %s157 = sadd.s32 %s156, 1
      %p160 = scmp.eq.s32.totalorder %s17, 2
      %p161 = scmp.ne.s32.totalorder %s156, %s158
      %p162 = scmp.eq.s32.totalorder %s17, 0
      %p163 = por %p161, %p162
      %p164 = scmp.ne.s32.totalorder %s156, %s158
      %p165 = scmp.eq.s32.totalorder %s22, 2
      %p166 = por %p164, %p165
      %p167 = scmp.ne.s32.totalorder %s158, %s159
      %p168 = scmp.eq.s32.totalorder %s22, 0
      %p169 = por %p167, %p168
      %p170 = scmp.ne.s32.totalorder %s158, %s159
      %p171 = scmp.eq.s32.totalorder %s23, 2
      %p172 = por %p170, %p171
      %p174 = scmp.ne.s32.totalorder %s159, %s173
      %p175 = scmp.eq.s32.totalorder %s23, 0
      %p176 = por %p174, %p175
      %s177 = ssub.s32 %s17, %s24
      %p178 = scmp.eq.s32.totalorder %s177, 0
      %s180 = sadd.s32 %s179, 1
      %s181 = scalar_select %p178, %s179, %s180
      %p184 = pneg %p178
      %p185 = scmp.eq.s32.totalorder %s17, 2
      %p186 = por %p184, %p185
      %p187 = scmp.ne.s32.totalorder %s179, %s182
      %p188 = scmp.eq.s32.totalorder %s17, 0
      %p189 = por %p187, %p188
      %p190 = scmp.ne.s32.totalorder %s179, %s182
      %p191 = scmp.eq.s32.totalorder %s22, 2
      %p192 = por %p190, %p191
      %p193 = scmp.ne.s32.totalorder %s182, %s183
      %p194 = scmp.eq.s32.totalorder %s22, 0
      %p195 = por %p193, %p194
      %p196 = scmp.ne.s32.totalorder %s182, %s183
      %p197 = scmp.eq.s32.totalorder %s23, 2
      %p198 = por %p196, %p197
      %p200 = scmp.ne.s32.totalorder %s183, %s199
      %p201 = scmp.eq.s32.totalorder %s23, 0
      %p202 = por %p200, %p201
      %p203 = scmp.le.s32.totalorder 1, %s17
      %p204 = scmp.lt.s32.totalorder %s17, 4
      %p205 = pnand %p203, %p204
      %p206 = pneg %p205
      // Predicated region
      $region9: #{tpu_custom_call.1} parent=5 // pred_check
        _
      $region10: #{tpu_custom_call.1} parent=5 // pred_check_branch
        %208 = sbr.rel (%p205) target = $region12
      $region11: #{tpu_custom_call.1} parent=5 // pred_region
        %s209 = ssub.s32 %s17, 1
        // Predicated region
        $region13: #{tpu_custom_call.1} parent=11 // pred_check
          %p210 = pneg %p64
        $region14: #{tpu_custom_call.1} parent=11 // pred_check_branch
          %212 = sbr.rel (%p210) target = $region16
        $region15: #{tpu_custom_call.1} parent=11 // pred_region
          _
        $region16: #{tpu_custom_call.1} parent=11 // pred_fallthru
          _
        // Predicated region
        $region17: #{tpu_custom_call.1} parent=11 // pred_check
          %p213 = pneg %p85
        $region18: #{tpu_custom_call.1} parent=11 // pred_check_branch
          %215 = sbr.rel (%p213) target = $region20
        $region19: #{tpu_custom_call.1} parent=11 // pred_region
          _
        $region20: #{tpu_custom_call.1} parent=11 // pred_fallthru
          _
        // Predicated region
        $region21: #{tpu_custom_call.1} parent=11 // pred_check
          %p216 = pneg %p106
        $region22: #{tpu_custom_call.1} parent=11 // pred_check_branch
          %218 = sbr.rel (%p216) target = $region24
        $region23: #{tpu_custom_call.1} parent=11 // pred_region
          _
        $region24: #{tpu_custom_call.1} parent=11 // pred_fallthru
          _
        // Predicated region
        $region25: #{tpu_custom_call.1} parent=11 // pred_check
          %p219 = pneg %p127
        $region26: #{tpu_custom_call.1} parent=11 // pred_check_branch
          %221 = sbr.rel (%p219) target = $region28
        $region27: #{tpu_custom_call.1} parent=11 // pred_region
          _
        $region28: #{tpu_custom_call.1} parent=11 // pred_fallthru
          _
        // Predicated region
        $region29: #{tpu_custom_call.1} parent=11 // pred_check
          %p222 = pneg %p148
        $region30: #{tpu_custom_call.1} parent=11 // pred_check_branch
          %224 = sbr.rel (%p222) target = $region32
        $region31: #{tpu_custom_call.1} parent=11 // pred_region
          _
        $region32: #{tpu_custom_call.1} parent=11 // pred_fallthru
          _
        // Predicated region
        $region33: #{tpu_custom_call.1} parent=11 // pred_check
          %p225 = pneg %p169
        $region34: #{tpu_custom_call.1} parent=11 // pred_check_branch
          %227 = sbr.rel (%p225) target = $region36
        $region35: #{tpu_custom_call.1} parent=11 // pred_region
          _
        $region36: #{tpu_custom_call.1} parent=11 // pred_fallthru
          _
      $region12: #{tpu_custom_call.1} parent=5 // pred_fallthru
        _
      %p228 = scmp.lt.s32.totalorder %s17, 3
      // Predicated region
      $region37: #{tpu_custom_call.1} parent=5 // pred_check
        %p229 = pneg %p228
      $region38: #{tpu_custom_call.1} parent=5 // pred_check_branch
        %231 = sbr.rel (%p229) target = $region40
      $region39: #{tpu_custom_call.1} parent=5 // pred_region
        // Predicated region
        $region41: #{tpu_custom_call.1} parent=39 // pred_check
          %p232 = pneg %p37
        $region42: #{tpu_custom_call.1} parent=39 // pred_check_branch
          %234 = sbr.rel (%p232) target = $region44
        $region43: #{tpu_custom_call.1} parent=39 // pred_region
          %s235 = smul.u32 16, %s17
          %p236 = scmp.lt.s32.totalorder %s235, 47
          %s237 = scalar_select %p236, %s235, 47
          %s238 = smul.addr %s237, 8
          %s239 = scalar_lea.vmem %s0, %s238
          %s240 = smul.u32 16, %s17
        $region44: #{tpu_custom_call.1} parent=39 // pred_fallthru
          _
      $region40: #{tpu_custom_call.1} parent=5 // pred_fallthru
        _
      %p241 = scmp.le.s32.totalorder 1, %s17
      %p242 = scmp.lt.s32.totalorder %s17, 4
      %p243 = pnand %p241, %p242
      %p244 = pneg %p243
      // Predicated region
      $region45: #{tpu_custom_call.1} parent=5 // pred_check
        _
      $region46: #{tpu_custom_call.1} parent=5 // pred_check_branch
        %246 = sbr.rel (%p243) target = $region48
      $region47: #{tpu_custom_call.1} parent=5 // pred_region
        %s247 = ssub.s32 %s17, 1
        %s248 = smul.u32 16, %s22
        %p249 = scmp.lt.s32.totalorder %s248, 47
        %s250 = scalar_select %p249, %s248, 47
        %s251 = smul.addr %s250, 8
        %s252 = scalar_lea.vmem %s0, %s251
        %p253 = pneg %p43
        %p254 = pneg %p40
        %p255 = pneg %p64
        %p256 = pneg %p61
        %p257 = pneg %p85
        %p258 = pneg %p82
        %p259 = pneg %p106
        %p260 = pneg %p103
        %p261 = pneg %p127
        %p262 = pneg %p124
        %p263 = pneg %p148
        %p264 = pneg %p145
        %p265 = pneg %p169
        %p266 = pneg %p166
        %p267 = pneg %p195
        %p268 = pneg %p192
        %s269 = sand.u32 %s182, 1
        %s270 = scalar_lea.sflag [#allocation4], %s269
        %s271 = sand.u32 %s182, 1
        %s272 = scalar_lea.vmem [#allocation3], %s271
        %s273 = smul.u32 16, %s22
        %p274 = scmp.lt.s32.totalorder %s273, 47
        %s275 = scalar_select %p274, %s273, 47
        %s276 = smul.addr %s275, 8
        %s277 = scalar_lea.vmem %s0, %s276
        %s278 = smul.u32 16, %s22
        %v279 = vld [vmem:[%s277] sm:$0xff]
        %v280 = vld [vmem:[%s277 + $0x8] sm:$0xff]
        %v281 = vld [vmem:[%s277 + $0x10] sm:$0xff]
        %v282 = vld [vmem:[%s277 + $0x18] sm:$0xff]
        %v283 = vld [vmem:[%s277 + $0x20] sm:$0xff]
        %v284 = vld [vmem:[%s277 + $0x28] sm:$0xff]
        %v285 = vld [vmem:[%s277 + $0x30] sm:$0xff]
        %v286 = vld [vmem:[%s277 + $0x38] sm:$0xff]
        %v287 = vld [vmem:[%s277 + $0x40] sm:$0xff]
        %v288 = vld [vmem:[%s277 + $0x48] sm:$0xff]
        %v289 = vld [vmem:[%s277 + $0x50] sm:$0xff]
        %v290 = vld [vmem:[%s277 + $0x58] sm:$0xff]
        %v291 = vld [vmem:[%s277 + $0x60] sm:$0xff]
        %v292 = vld [vmem:[%s277 + $0x68] sm:$0xff]
        %v293 = vld [vmem:[%s277 + $0x70] sm:$0xff]
        %v294 = vld [vmem:[%s277 + $0x78] sm:$0xff]
        %v295 = vld [vmem:[%s1] sm:$0xff]
        %v296 = vld [vmem:[%s1 + $0x8] sm:$0xff]
        %v297 = vld [vmem:[%s2] sm:$0x1]
        %v299 = vlaneseq
        %v300 = vshrl.u32 %v299, 7
        %v301 = vsub.s32 0, %v300
        %v302 = vrot.slane %v297, %v301
        %vm304 = vcmask 130048
        %v306 = vsel %vm304, %v279, 0
        %v309 = vsel %vm304, %v280, 0
        %v312 = vsel %vm304, %v281, 0
        %v315 = vsel %vm304, %v282, 0
        %v318 = vsel %vm304, %v283, 0
        %v321 = vsel %vm304, %v284, 0
        %v324 = vsel %vm304, %v285, 0
        %v327 = vsel %vm304, %v286, 0
        %v330 = vsel %vm304, %v287, 0
        %v333 = vsel %vm304, %v288, 0
        %v336 = vsel %vm304, %v289, 0
        %v339 = vsel %vm304, %v290, 0
        %v342 = vsel %vm304, %v291, 0
        %v345 = vsel %vm304, %v292, 0
        %v348 = vsel %vm304, %v293, 0
        %v351 = vsel %vm304, %v294, 0
        %353 = vmatprep.subr.mxu0 0.0
        %354 = vmatpush1.msra.mxu0 %v295
        %355 = vmatprep.subr.mxu0 0.0
        %356 = vmatpush1.msra.mxu0 %v296
        %357 = vmatprep.subr.mxu0 0.0
        %358 = vmatpush1.msra.mxu0 0.0
        %359 = vmatprep.subr.mxu0 0.0
        %360 = vmatpush1.msra.mxu0 0.0
        %361 = vmatprep.subr.mxu0 0.0
        %362 = vmatpush1.msra.mxu0 0.0
        %363 = vmatprep.subr.mxu0 0.0
        %364 = vmatpush1.msra.mxu0 0.0
        %365 = vmatprep.subr.mxu0 0.0
        %366 = vmatpush1.msra.mxu0 0.0
        %367 = vmatprep.subr.mxu0 0.0
        %368 = vmatpush1.msra.mxu0 0.0
        %369 = vmatprep.subr.mxu0 0.0
        %370 = vmatpush1.msra.mxu0 0.0
        %371 = vmatprep.subr.mxu0 0.0
        %372 = vmatpush1.msra.mxu0 0.0
        %373 = vmatprep.subr.mxu0 0.0
        %374 = vmatpush1.msra.mxu0 0.0
        %375 = vmatprep.subr.mxu0 0.0
        %376 = vmatpush1.msra.mxu0 0.0
        %377 = vmatprep.subr.mxu0 0.0
        %378 = vmatpush1.msra.mxu0 0.0
        %379 = vmatprep.subr.mxu0 0.0
        %380 = vmatpush1.msra.mxu0 0.0
        %381 = vmatprep.subr.mxu0 0.0
        %382 = vmatpush1.msra.mxu0 0.0
        %383 = vmatprep.subr.mxu0 0.0
        %384 = vmatpush1.msra.mxu0 0.0
        %385 = vmatprep.subr.mxu0 0.0
        %386 = vmatpush1.msra.mxu0 0.0
        %387 = vmatprep.subr.mxu0 0.0
        %388 = vmatpush1.msra.mxu0 0.0
        %389 = vmatprep.subr.mxu0 0.0
        %390 = vmatpush1.msra.mxu0 0.0
        %391 = vmatprep.subr.mxu0 0.0
        %392 = vmatpush1.msra.mxu0 0.0
        %393 = vmatprep.subr.mxu0 0.0
        %394 = vmatpush1.msra.mxu0 0.0
        %395 = vmatprep.subr.mxu0 0.0
        %396 = vmatpush1.msra.mxu0 0.0
        %397 = vmatprep.subr.mxu0 0.0
        %398 = vmatpush1.msra.mxu0 0.0
        %399 = vmatprep.subr.mxu0 0.0
        %400 = vmatpush1.msra.mxu0 0.0
        %401 = vmatprep.subr.mxu0 0.0
        %402 = vmatpush1.msra.mxu0 0.0
        %403 = vmatprep.subr.mxu0 0.0
        %404 = vmatpush1.msra.mxu0 0.0
        %405 = vmatprep.subr.mxu0 0.0
        %406 = vmatpush1.msra.mxu0 0.0
        %407 = vmatprep.subr.mxu0 0.0
        %408 = vmatpush1.msra.mxu0 0.0
        %409 = vmatprep.subr.mxu0 0.0
        %410 = vmatpush1.msra.mxu0 0.0
        %411 = vmatprep.subr.mxu0 0.0
        %412 = vmatpush1.msra.mxu0 0.0
        %413 = vmatprep.subr.mxu0 0.0
        %414 = vmatpush1.msra.mxu0 0.0
        %415 = vmatprep.subr.mxu0 0.0
        %416 = vmatpush1.msra.mxu0 0.0
        %417 = vmatprep.mubr.f32.mxu0 0.0
        %418 = vmatmul.mubr.f32.gmra.mrb[0].mxu0 %v306
        %v419 = vpop.f32.mrb[0].mxu0
        %v420 = vadd.f32 %v302, %v419
        %v421 = vpop.f32.mrb[0].mxu0
        %422 = vmatprep.mubr.f32.mxu0 0.0
        %423 = vmatmul.mubr.f32.gmra.mrb[0].mxu0 %v309
        %v424 = vpop.f32.mrb[0].mxu0
        %v425 = vadd.f32 %v302, %v424
        %v426 = vpop.f32.mrb[0].mxu0
        %427 = vmatprep.mubr.f32.mxu0 0.0
        %428 = vmatmul.mubr.f32.gmra.mrb[0].mxu0 %v312
        %v429 = vpop.f32.mrb[0].mxu0
        %v430 = vadd.f32 %v302, %v429
        %v431 = vpop.f32.mrb[0].mxu0
        %432 = vmatprep.mubr.f32.mxu0 0.0
        %433 = vmatmul.mubr.f32.gmra.mrb[0].mxu0 %v315
        %v434 = vpop.f32.mrb[0].mxu0
        %v435 = vadd.f32 %v302, %v434
        %v436 = vpop.f32.mrb[0].mxu0
        %437 = vmatprep.mubr.f32.mxu0 0.0
        %438 = vmatmul.mubr.f32.gmra.mrb[0].mxu0 %v318
        %v439 = vpop.f32.mrb[0].mxu0
        %v440 = vadd.f32 %v302, %v439
        %v441 = vpop.f32.mrb[0].mxu0
        %442 = vmatprep.mubr.f32.mxu0 0.0
        %443 = vmatmul.mubr.f32.gmra.mrb[0].mxu0 %v321
        %v444 = vpop.f32.mrb[0].mxu0
        %v445 = vadd.f32 %v302, %v444
        %v446 = vpop.f32.mrb[0].mxu0
        %447 = vmatprep.mubr.f32.mxu0 0.0
        %448 = vmatmul.mubr.f32.gmra.mrb[0].mxu0 %v324
        %v449 = vpop.f32.mrb[0].mxu0
        %v450 = vadd.f32 %v302, %v449
        %v451 = vpop.f32.mrb[0].mxu0
        %452 = vmatprep.mubr.f32.mxu0 0.0
        %453 = vmatmul.mubr.f32.gmra.mrb[0].mxu0 %v327
        %v454 = vpop.f32.mrb[0].mxu0
        %v455 = vadd.f32 %v302, %v454
        %v456 = vpop.f32.mrb[0].mxu0
        %457 = vmatprep.mubr.f32.mxu0 0.0
        %458 = vmatmul.mubr.f32.gmra.mrb[0].mxu0 %v330
        %v459 = vpop.f32.mrb[0].mxu0
        %v460 = vadd.f32 %v302, %v459
        %v461 = vpop.f32.mrb[0].mxu0
        %462 = vmatprep.mubr.f32.mxu0 0.0
        %463 = vmatmul.mubr.f32.gmra.mrb[0].mxu0 %v333
        %v464 = vpop.f32.mrb[0].mxu0
        %v465 = vadd.f32 %v302, %v464
        %v466 = vpop.f32.mrb[0].mxu0
        %467 = vmatprep.mubr.f32.mxu0 0.0
        %468 = vmatmul.mubr.f32.gmra.mrb[0].mxu0 %v336
        %v469 = vpop.f32.mrb[0].mxu0
        %v470 = vadd.f32 %v302, %v469
        %v471 = vpop.f32.mrb[0].mxu0
        %472 = vmatprep.mubr.f32.mxu0 0.0
        %473 = vmatmul.mubr.f32.gmra.mrb[0].mxu0 %v339
        %v474 = vpop.f32.mrb[0].mxu0
        %v475 = vadd.f32 %v302, %v474
        %v476 = vpop.f32.mrb[0].mxu0
        %477 = vmatprep.mubr.f32.mxu0 0.0
        %478 = vmatmul.mubr.f32.gmra.mrb[0].mxu0 %v342
        %v479 = vpop.f32.mrb[0].mxu0
        %v480 = vadd.f32 %v302, %v479
        %v481 = vpop.f32.mrb[0].mxu0
        %482 = vmatprep.mubr.f32.mxu0 0.0
        %483 = vmatmul.mubr.f32.gmra.mrb[0].mxu0 %v345
        %v484 = vpop.f32.mrb[0].mxu0
        %v485 = vadd.f32 %v302, %v484
        %v486 = vpop.f32.mrb[0].mxu0
        %487 = vmatprep.mubr.f32.mxu0 0.0
        %488 = vmatmul.mubr.f32.gmra.mrb[0].mxu0 %v348
        %v489 = vpop.f32.mrb[0].mxu0
        %v490 = vadd.f32 %v302, %v489
        %v491 = vpop.f32.mrb[0].mxu0
        %492 = vmatprep.mubr.f32.mxu0 0.0
        %493 = vmatmul.mubr.f32.gmra.mrb[0].mxu0 %v351
        %v494 = vpop.f32.mrb[0].mxu0
        %v495 = vadd.f32 %v302, %v494
        %v496 = vpop.f32.mrb[0].mxu0
        %497 = vdwg.mxu0
        %v498 = vmax.f32 %v420, 0.0
        %v499 = vmax.f32 %v425, 0.0
        %v500 = vmax.f32 %v430, 0.0
        %v501 = vmax.f32 %v435, 0.0
        %v502 = vmax.f32 %v440, 0.0
        %v503 = vmax.f32 %v445, 0.0
        %v504 = vmax.f32 %v450, 0.0
        %v505 = vmax.f32 %v455, 0.0
        %v506 = vmax.f32 %v460, 0.0
        %v507 = vmax.f32 %v465, 0.0
        %v508 = vmax.f32 %v470, 0.0
        %v509 = vmax.f32 %v475, 0.0
        %v510 = vmax.f32 %v480, 0.0
        %v511 = vmax.f32 %v485, 0.0
        %v512 = vmax.f32 %v490, 0.0
        %v513 = vmax.f32 %v495, 0.0
        %v514 = vld [vmem:[%s3] sm:$0xff]
        %v515 = vld [vmem:[%s3 + $0x8] sm:$0xff]
        %v516 = vld [vmem:[%s3 + $0x10] sm:$0xff]
        %v517 = vld [vmem:[%s3 + $0x18] sm:$0xff]
        %v518 = vld [vmem:[%s4] sm:$0x1]
        %v520 = vlaneseq
        %v521 = vshrl.u32 %v520, 7
        %v522 = vsub.s32 0, %v521
        %v523 = vrot.slane %v518, %v522
        %vm525 = vcmask 261120
        %v527 = vsel %vm525, %v498, 0
        %v530 = vsel %vm525, %v499, 0
        %v533 = vsel %vm525, %v500, 0
        %v536 = vsel %vm525, %v501, 0
        %v539 = vsel %vm525, %v502, 0
        %v542 = vsel %vm525, %v503, 0
        %v545 = vsel %vm525, %v504, 0
        %v548 = vsel %vm525, %v505, 0
        %v551 = vsel %vm525, %v506, 0
        %v554 = vsel %vm525, %v507, 0
        %v557 = vsel %vm525, %v508, 0
        %v560 = vsel %vm525, %v509, 0
        %v563 = vsel %vm525, %v510, 0
        %v566 = vsel %vm525, %v511, 0
        %v569 = vsel %vm525, %v512, 0
        %v572 = vsel %vm525, %v513, 0
        %574 = vmatprep.subr.mxu0 0.0
        %575 = vmatpush1.msra.mxu0 %v514
        %576 = vmatprep.subr.mxu0 0.0
        %577 = vmatpush1.msra.mxu0 %v515
        %578 = vmatprep.subr.mxu0 0.0
        %579 = vmatpush1.msra.mxu0 %v516
        %580 = vmatprep.subr.mxu0 0.0
        %581 = vmatpush1.msra.mxu0 %v517
        %582 = vmatprep.subr.mxu0 0.0
        %583 = vmatpush1.msra.mxu0 0.0
        %584 = vmatprep.subr.mxu0 0.0
        %585 = vmatpush1.msra.mxu0 0.0
        %586 = vmatprep.subr.mxu0 0.0
        %587 = vmatpush1.msra.mxu0 0.0
        %588 = vmatprep.subr.mxu0 0.0
        %589 = vmatpush1.msra.mxu0 0.0
        %590 = vmatprep.subr.mxu0 0.0
        %591 = vmatpush1.msra.mxu0 0.0
        %592 = vmatprep.subr.mxu0 0.0
        %593 = vmatpush1.msra.mxu0 0.0
        %594 = vmatprep.subr.mxu0 0.0
        %595 = vmatpush1.msra.mxu0 0.0
        %596 = vmatprep.subr.mxu0 0.0
        %597 = vmatpush1.msra.mxu0 0.0
        %598 = vmatprep.subr.mxu0 0.0
        %599 = vmatpush1.msra.mxu0 0.0
        %600 = vmatprep.subr.mxu0 0.0
        %601 = vmatpush1.msra.mxu0 0.0
        %602 = vmatprep.subr.mxu0 0.0
        %603 = vmatpush1.msra.mxu0 0.0
        %604 = vmatprep.subr.mxu0 0.0
        %605 = vmatpush1.msra.mxu0 0.0
        %606 = vmatprep.subr.mxu0 0.0
        %607 = vmatpush1.msra.mxu0 0.0
        %608 = vmatprep.subr.mxu0 0.0
        %609 = vmatpush1.msra.mxu0 0.0
        %610 = vmatprep.subr.mxu0 0.0
        %611 = vmatpush1.msra.mxu0 0.0
        %612 = vmatprep.subr.mxu0 0.0
        %613 = vmatpush1.msra.mxu0 0.0
        %614 = vmatprep.subr.mxu0 0.0
        %615 = vmatpush1.msra.mxu0 0.0
        %616 = vmatprep.subr.mxu0 0.0
        %617 = vmatpush1.msra.mxu0 0.0
        %618 = vmatprep.subr.mxu0 0.0
        %619 = vmatpush1.msra.mxu0 0.0
        %620 = vmatprep.subr.mxu0 0.0
        %621 = vmatpush1.msra.mxu0 0.0
        %622 = vmatprep.subr.mxu0 0.0
        %623 = vmatpush1.msra.mxu0 0.0
        %624 = vmatprep.subr.mxu0 0.0
        %625 = vmatpush1.msra.mxu0 0.0
        %626 = vmatprep.subr.mxu0 0.0
        %627 = vmatpush1.msra.mxu0 0.0
        %628 = vmatprep.subr.mxu0 0.0
        %629 = vmatpush1.msra.mxu0 0.0
        %630 = vmatprep.subr.mxu0 0.0
        %631 = vmatpush1.msra.mxu0 0.0
        %632 = vmatprep.subr.mxu0 0.0
        %633 = vmatpush1.msra.mxu0 0.0
        %634 = vmatprep.subr.mxu0 0.0
        %635 = vmatpush1.msra.mxu0 0.0
        %636 = vmatprep.subr.mxu0 0.0
        %637 = vmatpush1.msra.mxu0 0.0
        %638 = vmatprep.mubr.f32.mxu0 0.0
        %639 = vmatmul.mubr.f32.gmra.mrb[0].mxu0 %v527
        %v640 = vpop.f32.mrb[0].mxu0
        %v641 = vadd.f32 %v523, %v640
        %v642 = vpop.f32.mrb[0].mxu0
        %643 = vmatprep.mubr.f32.mxu0 0.0
        %644 = vmatmul.mubr.f32.gmra.mrb[0].mxu0 %v530
        %v645 = vpop.f32.mrb[0].mxu0
        %v646 = vadd.f32 %v523, %v645
        %v647 = vpop.f32.mrb[0].mxu0
        %648 = vmatprep.mubr.f32.mxu0 0.0
        %649 = vmatmul.mubr.f32.gmra.mrb[0].mxu0 %v533
        %v650 = vpop.f32.mrb[0].mxu0
        %v651 = vadd.f32 %v523, %v650
        %v652 = vpop.f32.mrb[0].mxu0
        %653 = vmatprep.mubr.f32.mxu0 0.0
        %654 = vmatmul.mubr.f32.gmra.mrb[0].mxu0 %v536
        %v655 = vpop.f32.mrb[0].mxu0
        %v656 = vadd.f32 %v523, %v655
        %v657 = vpop.f32.mrb[0].mxu0
        %658 = vmatprep.mubr.f32.mxu0 0.0
        %659 = vmatmul.mubr.f32.gmra.mrb[0].mxu0 %v539
        %v660 = vpop.f32.mrb[0].mxu0
        %v661 = vadd.f32 %v523, %v660
        %v662 = vpop.f32.mrb[0].mxu0
        %663 = vmatprep.mubr.f32.mxu0 0.0
        %664 = vmatmul.mubr.f32.gmra.mrb[0].mxu0 %v542
        %v665 = vpop.f32.mrb[0].mxu0
        %v666 = vadd.f32 %v523, %v665
        %v667 = vpop.f32.mrb[0].mxu0
        %668 = vmatprep.mubr.f32.mxu0 0.0
        %669 = vmatmul.mubr.f32.gmra.mrb[0].mxu0 %v545
        %v670 = vpop.f32.mrb[0].mxu0
        %v671 = vadd.f32 %v523, %v670
        %v672 = vpop.f32.mrb[0].mxu0
        %673 = vmatprep.mubr.f32.mxu0 0.0
        %674 = vmatmul.mubr.f32.gmra.mrb[0].mxu0 %v548
        %v675 = vpop.f32.mrb[0].mxu0
        %v676 = vadd.f32 %v523, %v675
        %v677 = vpop.f32.mrb[0].mxu0
        %678 = vmatprep.mubr.f32.mxu0 0.0
        %679 = vmatmul.mubr.f32.gmra.mrb[0].mxu0 %v551
        %v680 = vpop.f32.mrb[0].mxu0
        %v681 = vadd.f32 %v523, %v680
        %v682 = vpop.f32.mrb[0].mxu0
        %683 = vmatprep.mubr.f32.mxu0 0.0
        %684 = vmatmul.mubr.f32.gmra.mrb[0].mxu0 %v554
        %v685 = vpop.f32.mrb[0].mxu0
        %v686 = vadd.f32 %v523, %v685
        %v687 = vpop.f32.mrb[0].mxu0
        %688 = vmatprep.mubr.f32.mxu0 0.0
        %689 = vmatmul.mubr.f32.gmra.mrb[0].mxu0 %v557
        %v690 = vpop.f32.mrb[0].mxu0
        %v691 = vadd.f32 %v523, %v690
        %v692 = vpop.f32.mrb[0].mxu0
        %693 = vmatprep.mubr.f32.mxu0 0.0
        %694 = vmatmul.mubr.f32.gmra.mrb[0].mxu0 %v560
        %v695 = vpop.f32.mrb[0].mxu0
        %v696 = vadd.f32 %v523, %v695
        %v697 = vpop.f32.mrb[0].mxu0
        %698 = vmatprep.mubr.f32.mxu0 0.0
        %699 = vmatmul.mubr.f32.gmra.mrb[0].mxu0 %v563
        %v700 = vpop.f32.mrb[0].mxu0
        %v701 = vadd.f32 %v523, %v700
        %v702 = vpop.f32.mrb[0].mxu0
        %703 = vmatprep.mubr.f32.mxu0 0.0
        %704 = vmatmul.mubr.f32.gmra.mrb[0].mxu0 %v566
        %v705 = vpop.f32.mrb[0].mxu0
        %v706 = vadd.f32 %v523, %v705
        %v707 = vpop.f32.mrb[0].mxu0
        %708 = vmatprep.mubr.f32.mxu0 0.0
        %709 = vmatmul.mubr.f32.gmra.mrb[0].mxu0 %v569
        %v710 = vpop.f32.mrb[0].mxu0
        %v711 = vadd.f32 %v523, %v710
        %v712 = vpop.f32.mrb[0].mxu0
        %713 = vmatprep.mubr.f32.mxu0 0.0
        %714 = vmatmul.mubr.f32.gmra.mrb[0].mxu0 %v572
        %v715 = vpop.f32.mrb[0].mxu0
        %v716 = vadd.f32 %v523, %v715
        %v717 = vpop.f32.mrb[0].mxu0
        %718 = vdwg.mxu0
        %v719 = vmax.f32 %v641, 0.0
        %v720 = vmax.f32 %v646, 0.0
        %v721 = vmax.f32 %v651, 0.0
        %v722 = vmax.f32 %v656, 0.0
        %v723 = vmax.f32 %v661, 0.0
        %v724 = vmax.f32 %v666, 0.0
        %v725 = vmax.f32 %v671, 0.0
        %v726 = vmax.f32 %v676, 0.0
        %v727 = vmax.f32 %v681, 0.0
        %v728 = vmax.f32 %v686, 0.0
        %v729 = vmax.f32 %v691, 0.0
        %v730 = vmax.f32 %v696, 0.0
        %v731 = vmax.f32 %v701, 0.0
        %v732 = vmax.f32 %v706, 0.0
        %v733 = vmax.f32 %v711, 0.0
        %v734 = vmax.f32 %v716, 0.0
        %v735 = vld [vmem:[%s5] sm:$0xff]
        %v737 = vsel %vm525, %v735, 0
        %v740 = vsel %vm525, %v719, 0
        %v743 = vsel %vm525, %v720, 0
        %v746 = vsel %vm525, %v721, 0
        %v749 = vsel %vm525, %v722, 0
        %v752 = vsel %vm525, %v723, 0
        %v755 = vsel %vm525, %v724, 0
        %v758 = vsel %vm525, %v725, 0
        %v761 = vsel %vm525, %v726, 0
        %v764 = vsel %vm525, %v727, 0
        %v767 = vsel %vm525, %v728, 0
        %v770 = vsel %vm525, %v729, 0
        %v773 = vsel %vm525, %v730, 0
        %v776 = vsel %vm525, %v731, 0
        %v779 = vsel %vm525, %v732, 0
        %v782 = vsel %vm525, %v733, 0
        %v785 = vsel %vm525, %v734, 0
        %787 = vmatprep.subr.mxu0 0.0
        %788 = vmatpush1.xpose.msra.mxu0 %v740
        %789 = vmatprep.subr.mxu0 0.0
        %790 = vmatpush1.xpose.msra.mxu0 %v743
        %791 = vmatprep.subr.mxu0 0.0
        %792 = vmatpush1.xpose.msra.mxu0 %v746
        %793 = vmatprep.subr.mxu0 0.0
        %794 = vmatpush1.xpose.msra.mxu0 %v749
        %795 = vmatprep.subr.mxu0 0.0
        %796 = vmatpush1.xpose.msra.mxu0 %v752
        %797 = vmatprep.subr.mxu0 0.0
        %798 = vmatpush1.xpose.msra.mxu0 %v755
        %799 = vmatprep.subr.mxu0 0.0
        %800 = vmatpush1.xpose.msra.mxu0 %v758
        %801 = vmatprep.subr.mxu0 0.0
        %802 = vmatpush1.xpose.msra.mxu0 %v761
        %803 = vmatprep.subr.mxu0 0.0
        %804 = vmatpush1.xpose.msra.mxu0 %v764
        %805 = vmatprep.subr.mxu0 0.0
        %806 = vmatpush1.xpose.msra.mxu0 %v767
        %807 = vmatprep.subr.mxu0 0.0
        %808 = vmatpush1.xpose.msra.mxu0 %v770
        %809 = vmatprep.subr.mxu0 0.0
        %810 = vmatpush1.xpose.msra.mxu0 %v773
        %811 = vmatprep.subr.mxu0 0.0
        %812 = vmatpush1.xpose.msra.mxu0 %v776
        %813 = vmatprep.subr.mxu0 0.0
        %814 = vmatpush1.xpose.msra.mxu0 %v779
        %815 = vmatprep.subr.mxu0 0.0
        %816 = vmatpush1.xpose.msra.mxu0 %v782
        %817 = vmatprep.subr.mxu0 0.0
        %818 = vmatpush1.xpose.msra.mxu0 %v785
        %819 = vmatprep.subr.mxu0 0.0
        %820 = vmatpush1.xpose.msra.mxu0 0.0
        %821 = vmatprep.subr.mxu0 0.0
        %822 = vmatpush1.xpose.msra.mxu0 0.0
        %823 = vmatprep.subr.mxu0 0.0
        %824 = vmatpush1.xpose.msra.mxu0 0.0
        %825 = vmatprep.subr.mxu0 0.0
        %826 = vmatpush1.xpose.msra.mxu0 0.0
        %827 = vmatprep.subr.mxu0 0.0
        %828 = vmatpush1.xpose.msra.mxu0 0.0
        %829 = vmatprep.subr.mxu0 0.0
        %830 = vmatpush1.xpose.msra.mxu0 0.0
        %831 = vmatprep.subr.mxu0 0.0
        %832 = vmatpush1.xpose.msra.mxu0 0.0
        %833 = vmatprep.subr.mxu0 0.0
        %834 = vmatpush1.xpose.msra.mxu0 0.0
        %835 = vmatprep.subr.mxu0 0.0
        %836 = vmatpush1.xpose.msra.mxu0 0.0
        %837 = vmatprep.subr.mxu0 0.0
        %838 = vmatpush1.xpose.msra.mxu0 0.0
        %839 = vmatprep.subr.mxu0 0.0
        %840 = vmatpush1.xpose.msra.mxu0 0.0
        %841 = vmatprep.subr.mxu0 0.0
        %842 = vmatpush1.xpose.msra.mxu0 0.0
        %843 = vmatprep.subr.mxu0 0.0
        %844 = vmatpush1.xpose.msra.mxu0 0.0
        %845 = vmatprep.subr.mxu0 0.0
        %846 = vmatpush1.xpose.msra.mxu0 0.0
        %847 = vmatprep.subr.mxu0 0.0
        %848 = vmatpush1.xpose.msra.mxu0 0.0
        %849 = vmatprep.subr.mxu0 0.0
        %850 = vmatpush1.xpose.msra.mxu0 0.0
        %851 = vmatprep.mubr.f32.mxu0 0.0
        %852 = vmatmul.mubr.f32.gmra.mrb[0].mxu0 %v737
        %v853 = vpop.f32.mrb[0].mxu0
        %v854 = vadd.f32 0.0, %v853
        %v855 = vpop.f32.mrb[0].mxu0
        %856 = vdwg.mxu0
        %s857 = sld [smem:[#allocation2]]
        %v858 = vstv %s857
        %v859 = vadd.f32 %v854, %v858
        %860 = vst [vmem:[%s272] sm:$0x1] %v859
        %s861 = sand.u32 %s182, 1
        %s862 = scalar_lea.sflag [#allocation4], %s861
        %s863 = sand.u32 %s182, 1
        %s864 = scalar_lea.vmem [#allocation3], %s863
        // Predicated region
        $region49: #{tpu_custom_call.1} parent=47 // pred_check
          %p865 = pneg %p192
        $region50: #{tpu_custom_call.1} parent=47 // pred_check_branch
          %867 = sbr.rel (%p865) target = $region52
        $region51: #{tpu_custom_call.1} parent=47 // pred_region
          %s869 = ssub.s32 16, 16
          %870 = vsyncadd %s862, %s869
          %s871 = smul.addr %s22, 16
          %s872 = scalar_lea.hbm %s7, %s871
          %s874 = sshll.u32 %s864, 4
          %s875 = int_to_ptr.vmem [resolvable:$true] %s874
          %877 = dma.vmem_to_hbm [thread:$0]  %s875, 16, %s872, %s862
        $region52: #{tpu_custom_call.1} parent=47 // pred_fallthru
          _
      $region48: #{tpu_custom_call.1} parent=5 // pred_fallthru
        _
      %p878 = scmp.le.s32.totalorder 2, %s17
      // Predicated region
      $region53: #{tpu_custom_call.1} parent=5 // pred_check
        %p879 = pneg %p878
      $region54: #{tpu_custom_call.1} parent=5 // pred_check_branch
        %881 = sbr.rel (%p879) target = $region56
      $region55: #{tpu_custom_call.1} parent=5 // pred_region
        %s882 = ssub.s32 %s17, 2
        // Predicated region
        $region57: #{tpu_custom_call.1} parent=55 // pred_check
          %p883 = pneg %p198
        $region58: #{tpu_custom_call.1} parent=55 // pred_check_branch
          %885 = sbr.rel (%p883) target = $region60
        $region59: #{tpu_custom_call.1} parent=55 // pred_region
          %s886 = sand.u32 %s183, 1
          %s887 = scalar_lea.sflag [#allocation4], %s886
          %s888 = sand.u32 %s183, 1
          %s889 = scalar_lea.vmem [#allocation3], %s888
          %890 = dma.done %s887, 16
        $region60: #{tpu_custom_call.1} parent=55 // pred_fallthru
          _
      $region56: #{tpu_custom_call.1} parent=5 // pred_fallthru
        _
    $region6: #{tpu_custom_call.1} parent=1 // loop_footer
      %s21 = sadd.s32 1, %s17
    $region7: #{tpu_custom_call.1} parent=1 // loop_footer_branch
      %16 = sbr.rel target = $region3
    $region8: #{tpu_custom_call.1} parent=1 // loop_exit
      _
    %891 = vsyncpa [#allocation4], 1
    %s892 = scalar_lea.sflag [#allocation4], 1
    %893 = vsyncpa %s892, 1

</llo_original>
